<compile_context>
chip_gen: v6e
topology: v6e:2x2x1
jax: 0.10.0
libtpu: 0.0.40
codegen_flags: <defaults>
</compile_context>

<pallas_src>
import functools

import jax
import jax.numpy as jnp
from jax.experimental import pallas as pl
from jax.experimental.pallas import tpu as pltpu


def channel_attention_kernel(x_ref, w1_ref, w2_ref, o_ref,
                             acc_sum_ref, acc_max_ref,
                             *, hw, hw_tile, lanes, b_tile, c_dim, rem):
    """Grid: (batch blocks, spatial tiles).  Spatial axis is the reduction."""
    s = pl.program_id(1)
    n_s = pl.num_programs(1)

    # ---- init accumulators at the first spatial tile of this batch block ----
    @pl.when(s == 0)
    def _init():
        acc_sum_ref[...] = jnp.zeros(acc_sum_ref.shape, acc_sum_ref.dtype)
        acc_max_ref[...] = jnp.full(acc_max_ref.shape, -jnp.inf, acc_max_ref.dtype)

    n_chunks = hw_tile // lanes
    # Static sublane row-blocks: (batch row, 8-channel group).
    c_groups = [(c0, min(8, c_dim - c0)) for c0 in range(0, c_dim, 8)]

    def accumulate(chunk_plan, valid_mask):
        """chunk_plan: static list of (chunk index, needs_mask).

        Row-block tiling keeps the live set tiny: two (<=8, lanes) f32
        accumulator slices + the current per-chunk cast of x.
        """
        for b in range(b_tile):
            for c0, cs in c_groups:
                sum_acc = acc_sum_ref[b, c0:c0 + cs, :]
                max_acc = acc_max_ref[b, c0:c0 + cs, :]
                for k, masked in chunk_plan:
                    # Per-chunk load + cast: no full-block f32 copy in VMEM.
                    chunk = x_ref[b, c0:c0 + cs,
                                  k * lanes:(k + 1) * lanes].astype(jnp.float32)
                    if masked:
                        m = valid_mask[:cs, :]
                        sum_acc = sum_acc + jnp.where(m, chunk, 0.0)
                        max_acc = jnp.maximum(max_acc, jnp.where(m, chunk, -jnp.inf))
                    else:
                        sum_acc = sum_acc + chunk
                        max_acc = jnp.maximum(max_acc, chunk)
                acc_sum_ref[b, c0:c0 + cs, :] = sum_acc
                acc_max_ref[b, c0:c0 + cs, :] = max_acc

    full_plan = [(k, False) for k in range(n_chunks)]

    if rem == 0:
        # Every spatial tile is full: no masking anywhere.
        accumulate(full_plan, None)
    else:
        # Only the LAST spatial tile is ragged; all earlier tiles run the
        # unmasked fast path.
        @pl.when(s < n_s - 1)
        def _full_tiles():
            accumulate(full_plan, None)

        @pl.when(s == n_s - 1)
        def _ragged_tile():
            n_full = rem // lanes              # fully-valid chunks
            tail = rem % lanes                 # valid lanes in boundary chunk
            plan = [(k, False) for k in range(n_full)]
            if tail:
                plan.append((n_full, True))
                group = min(8, c_dim)
                lane_iota = jax.lax.broadcasted_iota(jnp.int32, (group, lanes), 1)
                valid_mask = lane_iota < tail   # hoisted once; 1 vreg
            else:
                valid_mask = None
            # Chunks past the boundary are skipped statically (never loaded).
            accumulate(plan, valid_mask)

    # ---- finalize: single XLU reduce + one stacked FC + sigmoid ----
    @pl.when(s == n_s - 1)
    def _finalize():
        avg = jnp.sum(acc_sum_ref[...], axis=-1) * (1.0 / hw)   # (B_tile, C)
        mx = jnp.max(acc_max_ref[...], axis=-1)                  # (B_tile, C)

        # Stack avg/max so the shared MLP runs as ONE pair of dots.
        pooled = jnp.concatenate([avg, mx], axis=0)              # (2*B_tile, C)
        w1 = w1_ref[...].astype(jnp.float32)
        w2 = w2_ref[...].astype(jnp.float32)
        h = jnp.maximum(
            jnp.dot(pooled, w1, preferred_element_type=jnp.float32), 0.0)
        y = jnp.dot(h, w2, preferred_element_type=jnp.float32)   # (2*B_tile, C)

        out = y[:b_tile] + y[b_tile:]                            # avg_out + max_out
        # Padded batch rows (B % B_TILE != 0) compute garbage here but results
        # are row-independent and discarded on writeback — harmless.
        o_ref[...] = jax.nn.sigmoid(out)[:, :, None].astype(o_ref.dtype)


def channel_attention(x_nchw, w1, w2, *,
                      max_block_bytes=8 << 20, max_hw_tile=8192):
    """x_nchw: (B, C, H, W).  Returns (B, C, 1, 1), matching the torch module."""
    B, C, H, W = x_nchw.shape
    HW = H * W
    x_flat = x_nchw.reshape(B, C, HW)
    hidden = w1.shape[1]
    itemsize = jnp.dtype(x_nchw.dtype).itemsize

    # Batch tile: <= 8 rows (sublane-friendly) AND >= 2 blocks on the
    # "parallel" axis whenever B >= 2, so both v7x TensorCores get work.
    if B <= 1:
        B_TILE = 1
    else:
        B_TILE = min(8, -(-B // 2))

    # Spatial tile: multiple of 128 lanes, a few MiB per block so the
    # double-buffered stream stays VMEM-safe on every generation (incl. v7x);
    # HW_TILE never exceeds HW, so every accumulator lane sees valid data.
    if HW <= 128:
        HW_TILE = HW
    else:
        t = max_block_bytes // max(1, B_TILE * C * itemsize)
        t = min(t, max_hw_tile, HW)
        HW_TILE = max(128, (t // 128) * 128)
    LANES = min(HW_TILE, 128)
    rem = HW % HW_TILE

    n_b = pl.cdiv(B, B_TILE)
    n_s = pl.cdiv(HW, HW_TILE)

    # Explicit VMEM budget: 2x input block (default double-buffering — no
    # hidden full-block f32 cast anymore) + f32 scratch + weights + output +
    # headroom, clamped well under v7x's 64 MiB physical VMEM.
    block_bytes = B_TILE * C * HW_TILE * itemsize
    scratch_bytes = 2 * B_TILE * C * LANES * 4
    w_bytes = int((w1.size + w2.size) * jnp.dtype(w1.dtype).itemsize)
    out_bytes = B_TILE * C * itemsize
    vmem_limit = 2 * block_bytes + scratch_bytes + 2 * (w_bytes + out_bytes) + (4 << 20)
    vmem_limit = int(min(max(vmem_limit, 16 << 20), 48 << 20))

    kernel = functools.partial(
        channel_attention_kernel,
        hw=HW, hw_tile=HW_TILE, lanes=LANES, b_tile=B_TILE, c_dim=C, rem=rem)

    out = pl.pallas_call(
        kernel,
        # 3D output keeps the last-two block dims equal to the full array dims
        # even when B_TILE does not divide B (e.g. B_TILE=1, B=2).
        out_shape=jax.ShapeDtypeStruct((B, C, 1), x_nchw.dtype),
        grid_spec=pltpu.PrefetchScalarGridSpec(
            num_scalar_prefetch=0,
            grid=(n_b, n_s),
            in_specs=[
                # Streamed activation tiles.
                pl.BlockSpec((B_TILE, C, HW_TILE), lambda b, s: (b, 0, s)),
                # Weights: constant block index => loaded once, VMEM-resident.
                pl.BlockSpec((C, hidden), lambda b, s: (0, 0)),
                pl.BlockSpec((hidden, C), lambda b, s: (0, 0)),
            ],
            # Output block constant across the spatial (reduction) axis.
            out_specs=pl.BlockSpec((B_TILE, C, 1), lambda b, s: (b, 0, 0)),
            scratch_shapes=[
                pltpu.VMEM((B_TILE, C, LANES), jnp.float32),  # running sum
                pltpu.VMEM((B_TILE, C, LANES), jnp.float32),  # running max
            ],
        ),
        compiler_params=pltpu.CompilerParams(
            dimension_semantics=("parallel", "arbitrary"),
            vmem_limit_bytes=vmem_limit),
    )(x_flat, w1, w2)

    return out.reshape(B, C, 1, 1)


def channel_attention_ref(x_nchw, w1, w2):
    """Pure-JAX reference mirroring the PyTorch forward."""
    x = x_nchw.astype(jnp.float32)
    avg = jnp.mean(x, axis=(2, 3))          # (B, C)
    mx = jnp.max(x, axis=(2, 3))            # (B, C)

    def fc(v):
        return jnp.maximum(v @ w1, 0.0) @ w2

    out = fc(avg) + fc(mx)
    return jax.nn.sigmoid(out)[:, :, None, None].astype(x_nchw.dtype)


if __name__ == "__main__":
    # Module hardcodes hidden = in_planes // 16, so pick C >= 16.
    # H=W=18 -> HW=324, and max_hw_tile=128 forces 3 spatial tiles with a
    # partial edge tile, exercising the streamed reduction + masked edge tile.
    # B=2 with B_TILE=1 also exercises the multi-block "parallel" batch axis.
    B, C, H, W = 2, 32, 18, 18
    hidden = C // 16

    key = jax.random.PRNGKey(0)
    kx, k1, k2 = jax.random.split(key, 3)

    x = jax.random.normal(kx, (B, C, H, W), dtype=jnp.float32)
    # Deterministic synthetic weights for the two 1x1 convs (bias=False).
    w1 = jax.random.normal(k1, (C, hidden), dtype=jnp.float32) * 0.1  # conv1.weight.T
    w2 = jax.random.normal(k2, (hidden, C), dtype=jnp.float32) * 0.1  # conv2.weight.T

    out = channel_attention(x, w1, w2, max_hw_tile=128)
    out = jax.block_until_ready(out)

    ref = channel_attention_ref(x, w1, w2)
    assert out.shape == (B, C, 1, 1)
    assert jnp.allclose(out, ref, atol=1e-5, rtol=1e-5)

    print("KERNEL_OK")
</pallas_src>

<mosaic_0001>
module attributes {stable_mosaic.version = 11 : i64} {
  func.func @channel_attention_kernel(%arg0: i32, %arg1: i32, %arg2: memref<1x32x128xf32, #tpu.memory_space<vmem>>, %arg3: memref<32x2xf32, #tpu.memory_space<vmem>>, %arg4: memref<2x32xf32, #tpu.memory_space<vmem>>, %arg5: memref<1x32x1xf32, #tpu.memory_space<vmem>>, %arg6: memref<1x32x128xf32, #tpu.memory_space<vmem>>, %arg7: memref<1x32x128xf32, #tpu.memory_space<vmem>>) attributes {dimension_semantics = [#tpu.dimension_semantics<parallel>, #tpu.dimension_semantics<arbitrary>], iteration_bounds = array<i64: 2, 3>, scalar_prefetch = 0 : i64, scratch_operands = 2 : i64, tpu.core_type = #tpu.core_type<tc>, window_params = [{transform_indices = @transform_0, window_bounds = array<i64: 1, 32, 128>}, {pipeline_mode = #tpu.pipeline_mode<synchronous>, transform_indices = @transform_1, window_bounds = array<i64: 32, 2>}, {pipeline_mode = #tpu.pipeline_mode<synchronous>, transform_indices = @transform_2, window_bounds = array<i64: 2, 32>}, {transform_indices = @transform_3, window_bounds = array<i64: 1, 32, 1>}]} {
    %c0_i32 = arith.constant 0 : i32
    %0 = arith.cmpi eq, %arg1, %c0_i32 : i32
    %1 = arith.extui %0 : i1 to i32
    %c0_i32_0 = arith.constant 0 : i32
    %2 = arith.cmpi ne, %1, %c0_i32_0 : i32
    scf.if %2 {
      %cst = arith.constant 0.000000e+00 : f32
      %12 = vector.broadcast %cst : f32 to vector<1x32x128xf32>
      %c0 = arith.constant 0 : index
      %c0_6 = arith.constant 0 : index
      %c0_7 = arith.constant 0 : index
      %13 = vector.load %arg6[%c0, %c0_6, %c0_7] : memref<1x32x128xf32, #tpu.memory_space<vmem>>, vector<1x32x128xf32>
      tpu.vector_store %arg6[%c0, %c0_6, %c0_7], %12 {strides = array<i32>} : memref<1x32x128xf32, #tpu.memory_space<vmem>>, vector<1x32x128xf32>,
      %cst_8 = arith.constant 0xFF800000 : f32
      %14 = vector.broadcast %cst_8 : f32 to vector<1x32x128xf32>
      %c0_9 = arith.constant 0 : index
      %c0_10 = arith.constant 0 : index
      %c0_11 = arith.constant 0 : index
      %15 = vector.load %arg7[%c0_9, %c0_10, %c0_11] : memref<1x32x128xf32, #tpu.memory_space<vmem>>, vector<1x32x128xf32>
      tpu.vector_store %arg7[%c0_9, %c0_10, %c0_11], %14 {strides = array<i32>} : memref<1x32x128xf32, #tpu.memory_space<vmem>>, vector<1x32x128xf32>,
    } else {
    }
    %c2_i32 = arith.constant 2 : i32
    %3 = arith.cmpi slt, %arg1, %c2_i32 : i32
    %4 = arith.extui %3 : i1 to i32
    %c0_i32_1 = arith.constant 0 : i32
    %5 = arith.cmpi ne, %4, %c0_i32_1 : i32
    scf.if %5 {
      %c0 = arith.constant 0 : index
      %c0_6 = arith.constant 0 : index
      %c0_7 = arith.constant 0 : index
      %12 = vector.load %arg6[%c0, %c0_6, %c0_7] : memref<1x32x128xf32, #tpu.memory_space<vmem>>, vector<1x8x128xf32>
      %13 = vector.shape_cast %12 : vector<1x8x128xf32> to vector<8x128xf32>
      %c0_8 = arith.constant 0 : index
      %c0_9 = arith.constant 0 : index
      %c0_10 = arith.constant 0 : index
      %14 = vector.load %arg7[%c0_8, %c0_9, %c0_10] : memref<1x32x128xf32, #tpu.memory_space<vmem>>, vector<1x8x128xf32>
      %15 = vector.shape_cast %14 : vector<1x8x128xf32> to vector<8x128xf32>
      %c0_11 = arith.constant 0 : index
      %c0_12 = arith.constant 0 : index
      %c0_13 = arith.constant 0 : index
      %16 = vector.load %arg2[%c0_11, %c0_12, %c0_13] : memref<1x32x128xf32, #tpu.memory_space<vmem>>, vector<1x8x128xf32>
      %17 = vector.shape_cast %16 : vector<1x8x128xf32> to vector<8x128xf32>
      %18 = arith.addf %13, %17 : vector<8x128xf32>
      %19 = arith.maximumf %15, %17 : vector<8x128xf32>
      %c0_14 = arith.constant 0 : index
      %c0_15 = arith.constant 0 : index
      %c0_16 = arith.constant 0 : index
      %20 = vector.load %arg6[%c0_14, %c0_15, %c0_16] : memref<1x32x128xf32, #tpu.memory_space<vmem>>, vector<1x8x128xf32>
      %21 = vector.shape_cast %20 : vector<1x8x128xf32> to vector<8x128xf32>
      %22 = vector.shape_cast %18 : vector<8x128xf32> to vector<1x8x128xf32>
      tpu.vector_store %arg6[%c0_14, %c0_15, %c0_16], %22 {strides = array<i32>} : memref<1x32x128xf32, #tpu.memory_space<vmem>>, vector<1x8x128xf32>,
      %c0_17 = arith.constant 0 : index
      %c0_18 = arith.constant 0 : index
      %c0_19 = arith.constant 0 : index
      %23 = vector.load %arg7[%c0_17, %c0_18, %c0_19] : memref<1x32x128xf32, #tpu.memory_space<vmem>>, vector<1x8x128xf32>
      %24 = vector.shape_cast %23 : vector<1x8x128xf32> to vector<8x128xf32>
      %25 = vector.shape_cast %19 : vector<8x128xf32> to vector<1x8x128xf32>
      tpu.vector_store %arg7[%c0_17, %c0_18, %c0_19], %25 {strides = array<i32>} : memref<1x32x128xf32, #tpu.memory_space<vmem>>, vector<1x8x128xf32>,
      %c0_20 = arith.constant 0 : index
      %c8 = arith.constant 8 : index
      %c0_21 = arith.constant 0 : index
      %26 = vector.load %arg6[%c0_20, %c8, %c0_21] : memref<1x32x128xf32, #tpu.memory_space<vmem>>, vector<1x8x128xf32>
      %27 = vector.shape_cast %26 : vector<1x8x128xf32> to vector<8x128xf32>
      %c0_22 = arith.constant 0 : index
      %c8_23 = arith.constant 8 : index
      %c0_24 = arith.constant 0 : index
      %28 = vector.load %arg7[%c0_22, %c8_23, %c0_24] : memref<1x32x128xf32, #tpu.memory_space<vmem>>, vector<1x8x128xf32>
      %29 = vector.shape_cast %28 : vector<1x8x128xf32> to vector<8x128xf32>
      %c0_25 = arith.constant 0 : index
      %c8_26 = arith.constant 8 : index
      %c0_27 = arith.constant 0 : index
      %30 = vector.load %arg2[%c0_25, %c8_26, %c0_27] : memref<1x32x128xf32, #tpu.memory_space<vmem>>, vector<1x8x128xf32>
      %31 = vector.shape_cast %30 : vector<1x8x128xf32> to vector<8x128xf32>
      %32 = arith.addf %27, %31 : vector<8x128xf32>
      %33 = arith.maximumf %29, %31 : vector<8x128xf32>
      %c0_28 = arith.constant 0 : index
      %c8_29 = arith.constant 8 : index
      %c0_30 = arith.constant 0 : index
      %34 = vector.load %arg6[%c0_28, %c8_29, %c0_30] : memref<1x32x128xf32, #tpu.memory_space<vmem>>, vector<1x8x128xf32>
      %35 = vector.shape_cast %34 : vector<1x8x128xf32> to vector<8x128xf32>
      %36 = vector.shape_cast %32 : vector<8x128xf32> to vector<1x8x128xf32>
      tpu.vector_store %arg6[%c0_28, %c8_29, %c0_30], %36 {strides = array<i32>} : memref<1x32x128xf32, #tpu.memory_space<vmem>>, vector<1x8x128xf32>,
      %c0_31 = arith.constant 0 : index
      %c8_32 = arith.constant 8 : index
      %c0_33 = arith.constant 0 : index
      %37 = vector.load %arg7[%c0_31, %c8_32, %c0_33] : memref<1x32x128xf32, #tpu.memory_space<vmem>>, vector<1x8x128xf32>
      %38 = vector.shape_cast %37 : vector<1x8x128xf32> to vector<8x128xf32>
      %39 = vector.shape_cast %33 : vector<8x128xf32> to vector<1x8x128xf32>
      tpu.vector_store %arg7[%c0_31, %c8_32, %c0_33], %39 {strides = array<i32>} : memref<1x32x128xf32, #tpu.memory_space<vmem>>, vector<1x8x128xf32>,
      %c0_34 = arith.constant 0 : index
      %c16 = arith.constant 16 : index
      %c0_35 = arith.constant 0 : index
      %40 = vector.load %arg6[%c0_34, %c16, %c0_35] : memref<1x32x128xf32, #tpu.memory_space<vmem>>, vector<1x8x128xf32>
      %41 = vector.shape_cast %40 : vector<1x8x128xf32> to vector<8x128xf32>
      %c0_36 = arith.constant 0 : index
      %c16_37 = arith.constant 16 : index
      %c0_38 = arith.constant 0 : index
      %42 = vector.load %arg7[%c0_36, %c16_37, %c0_38] : memref<1x32x128xf32, #tpu.memory_space<vmem>>, vector<1x8x128xf32>
      %43 = vector.shape_cast %42 : vector<1x8x128xf32> to vector<8x128xf32>
      %c0_39 = arith.constant 0 : index
      %c16_40 = arith.constant 16 : index
      %c0_41 = arith.constant 0 : index
      %44 = vector.load %arg2[%c0_39, %c16_40, %c0_41] : memref<1x32x128xf32, #tpu.memory_space<vmem>>, vector<1x8x128xf32>
      %45 = vector.shape_cast %44 : vector<1x8x128xf32> to vector<8x128xf32>
      %46 = arith.addf %41, %45 : vector<8x128xf32>
      %47 = arith.maximumf %43, %45 : vector<8x128xf32>
      %c0_42 = arith.constant 0 : index
      %c16_43 = arith.constant 16 : index
      %c0_44 = arith.constant 0 : index
      %48 = vector.load %arg6[%c0_42, %c16_43, %c0_44] : memref<1x32x128xf32, #tpu.memory_space<vmem>>, vector<1x8x128xf32>
      %49 = vector.shape_cast %48 : vector<1x8x128xf32> to vector<8x128xf32>
      %50 = vector.shape_cast %46 : vector<8x128xf32> to vector<1x8x128xf32>
      tpu.vector_store %arg6[%c0_42, %c16_43, %c0_44], %50 {strides = array<i32>} : memref<1x32x128xf32, #tpu.memory_space<vmem>>, vector<1x8x128xf32>,
      %c0_45 = arith.constant 0 : index
      %c16_46 = arith.constant 16 : index
      %c0_47 = arith.constant 0 : index
      %51 = vector.load %arg7[%c0_45, %c16_46, %c0_47] : memref<1x32x128xf32, #tpu.memory_space<vmem>>, vector<1x8x128xf32>
      %52 = vector.shape_cast %51 : vector<1x8x128xf32> to vector<8x128xf32>
      %53 = vector.shape_cast %47 : vector<8x128xf32> to vector<1x8x128xf32>
      tpu.vector_store %arg7[%c0_45, %c16_46, %c0_47], %53 {strides = array<i32>} : memref<1x32x128xf32, #tpu.memory_space<vmem>>, vector<1x8x128xf32>,
      %c0_48 = arith.constant 0 : index
      %c24 = arith.constant 24 : index
      %c0_49 = arith.constant 0 : index
      %54 = vector.load %arg6[%c0_48, %c24, %c0_49] : memref<1x32x128xf32, #tpu.memory_space<vmem>>, vector<1x8x128xf32>
      %55 = vector.shape_cast %54 : vector<1x8x128xf32> to vector<8x128xf32>
      %c0_50 = arith.constant 0 : index
      %c24_51 = arith.constant 24 : index
      %c0_52 = arith.constant 0 : index
      %56 = vector.load %arg7[%c0_50, %c24_51, %c0_52] : memref<1x32x128xf32, #tpu.memory_space<vmem>>, vector<1x8x128xf32>
      %57 = vector.shape_cast %56 : vector<1x8x128xf32> to vector<8x128xf32>
      %c0_53 = arith.constant 0 : index
      %c24_54 = arith.constant 24 : index
      %c0_55 = arith.constant 0 : index
      %58 = vector.load %arg2[%c0_53, %c24_54, %c0_55] : memref<1x32x128xf32, #tpu.memory_space<vmem>>, vector<1x8x128xf32>
      %59 = vector.shape_cast %58 : vector<1x8x128xf32> to vector<8x128xf32>
      %60 = arith.addf %55, %59 : vector<8x128xf32>
      %61 = arith.maximumf %57, %59 : vector<8x128xf32>
      %c0_56 = arith.constant 0 : index
      %c24_57 = arith.constant 24 : index
      %c0_58 = arith.constant 0 : index
      %62 = vector.load %arg6[%c0_56, %c24_57, %c0_58] : memref<1x32x128xf32, #tpu.memory_space<vmem>>, vector<1x8x128xf32>
      %63 = vector.shape_cast %62 : vector<1x8x128xf32> to vector<8x128xf32>
      %64 = vector.shape_cast %60 : vector<8x128xf32> to vector<1x8x128xf32>
      tpu.vector_store %arg6[%c0_56, %c24_57, %c0_58], %64 {strides = array<i32>} : memref<1x32x128xf32, #tpu.memory_space<vmem>>, vector<1x8x128xf32>,
      %c0_59 = arith.constant 0 : index
      %c24_60 = arith.constant 24 : index
      %c0_61 = arith.constant 0 : index
      %65 = vector.load %arg7[%c0_59, %c24_60, %c0_61] : memref<1x32x128xf32, #tpu.memory_space<vmem>>, vector<1x8x128xf32>
      %66 = vector.shape_cast %65 : vector<1x8x128xf32> to vector<8x128xf32>
      %67 = vector.shape_cast %61 : vector<8x128xf32> to vector<1x8x128xf32>
      tpu.vector_store %arg7[%c0_59, %c24_60, %c0_61], %67 {strides = array<i32>} : memref<1x32x128xf32, #tpu.memory_space<vmem>>, vector<1x8x128xf32>,
    } else {
    }
    %c2_i32_2 = arith.constant 2 : i32
    %6 = arith.cmpi eq, %arg1, %c2_i32_2 : i32
    %7 = arith.extui %6 : i1 to i32
    %c0_i32_3 = arith.constant 0 : i32
    %8 = arith.cmpi ne, %7, %c0_i32_3 : i32
    scf.if %8 {
      %12 = tpu.iota {dimensions = array<i32: 1>} : vector<8x128xi32>
      %c68_i32 = arith.constant 68 : i32
      %13 = vector.broadcast %c68_i32 : i32 to vector<8x128xi32>
      %14 = arith.cmpi slt, %12, %13 : vector<8x128xi32>
      %c0 = arith.constant 0 : index
      %c0_6 = arith.constant 0 : index
      %c0_7 = arith.constant 0 : index
      %15 = vector.load %arg6[%c0, %c0_6, %c0_7] : memref<1x32x128xf32, #tpu.memory_space<vmem>>, vector<1x8x128xf32>
      %16 = vector.shape_cast %15 : vector<1x8x128xf32> to vector<8x128xf32>
      %c0_8 = arith.constant 0 : index
      %c0_9 = arith.constant 0 : index
      %c0_10 = arith.constant 0 : index
      %17 = vector.load %arg7[%c0_8, %c0_9, %c0_10] : memref<1x32x128xf32, #tpu.memory_space<vmem>>, vector<1x8x128xf32>
      %18 = vector.shape_cast %17 : vector<1x8x128xf32> to vector<8x128xf32>
      %c0_11 = arith.constant 0 : index
      %c0_12 = arith.constant 0 : index
      %c0_13 = arith.constant 0 : index
      %19 = vector.load %arg2[%c0_11, %c0_12, %c0_13] : memref<1x32x128xf32, #tpu.memory_space<vmem>>, vector<1x8x128xf32>
      %20 = vector.shape_cast %19 : vector<1x8x128xf32> to vector<8x128xf32>
      %cst = arith.constant 0.000000e+00 : f32
      %21 = vector.broadcast %cst : f32 to vector<8x128xf32>
      %22 = arith.select %14, %20, %21 : vector<8x128xi1>, vector<8x128xf32>
      %23 = arith.addf %16, %22 : vector<8x128xf32>
      %cst_14 = arith.constant 0xFF800000 : f32
      %24 = vector.broadcast %cst_14 : f32 to vector<8x128xf32>
      %25 = arith.select %14, %20, %24 : vector<8x128xi1>, vector<8x128xf32>
      %26 = arith.maximumf %18, %25 : vector<8x128xf32>
      %c0_15 = arith.constant 0 : index
      %c0_16 = arith.constant 0 : index
      %c0_17 = arith.constant 0 : index
      %27 = vector.load %arg6[%c0_15, %c0_16, %c0_17] : memref<1x32x128xf32, #tpu.memory_space<vmem>>, vector<1x8x128xf32>
      %28 = vector.shape_cast %27 : vector<1x8x128xf32> to vector<8x128xf32>
      %29 = vector.shape_cast %23 : vector<8x128xf32> to vector<1x8x128xf32>
      tpu.vector_store %arg6[%c0_15, %c0_16, %c0_17], %29 {strides = array<i32>} : memref<1x32x128xf32, #tpu.memory_space<vmem>>, vector<1x8x128xf32>,
      %c0_18 = arith.constant 0 : index
      %c0_19 = arith.constant 0 : index
      %c0_20 = arith.constant 0 : index
      %30 = vector.load %arg7[%c0_18, %c0_19, %c0_20] : memref<1x32x128xf32, #tpu.memory_space<vmem>>, vector<1x8x128xf32>
      %31 = vector.shape_cast %30 : vector<1x8x128xf32> to vector<8x128xf32>
      %32 = vector.shape_cast %26 : vector<8x128xf32> to vector<1x8x128xf32>
      tpu.vector_store %arg7[%c0_18, %c0_19, %c0_20], %32 {strides = array<i32>} : memref<1x32x128xf32, #tpu.memory_space<vmem>>, vector<1x8x128xf32>,
      %c0_21 = arith.constant 0 : index
      %c8 = arith.constant 8 : index
      %c0_22 = arith.constant 0 : index
      %33 = vector.load %arg6[%c0_21, %c8, %c0_22] : memref<1x32x128xf32, #tpu.memory_space<vmem>>, vector<1x8x128xf32>
      %34 = vector.shape_cast %33 : vector<1x8x128xf32> to vector<8x128xf32>
      %c0_23 = arith.constant 0 : index
      %c8_24 = arith.constant 8 : index
      %c0_25 = arith.constant 0 : index
      %35 = vector.load %arg7[%c0_23, %c8_24, %c0_25] : memref<1x32x128xf32, #tpu.memory_space<vmem>>, vector<1x8x128xf32>
      %36 = vector.shape_cast %35 : vector<1x8x128xf32> to vector<8x128xf32>
      %c0_26 = arith.constant 0 : index
      %c8_27 = arith.constant 8 : index
      %c0_28 = arith.constant 0 : index
      %37 = vector.load %arg2[%c0_26, %c8_27, %c0_28] : memref<1x32x128xf32, #tpu.memory_space<vmem>>, vector<1x8x128xf32>
      %38 = vector.shape_cast %37 : vector<1x8x128xf32> to vector<8x128xf32>
      %cst_29 = arith.constant 0.000000e+00 : f32
      %39 = vector.broadcast %cst_29 : f32 to vector<8x128xf32>
      %40 = arith.select %14, %38, %39 : vector<8x128xi1>, vector<8x128xf32>
      %41 = arith.addf %34, %40 : vector<8x128xf32>
      %cst_30 = arith.constant 0xFF800000 : f32
      %42 = vector.broadcast %cst_30 : f32 to vector<8x128xf32>
      %43 = arith.select %14, %38, %42 : vector<8x128xi1>, vector<8x128xf32>
      %44 = arith.maximumf %36, %43 : vector<8x128xf32>
      %c0_31 = arith.constant 0 : index
      %c8_32 = arith.constant 8 : index
      %c0_33 = arith.constant 0 : index
      %45 = vector.load %arg6[%c0_31, %c8_32, %c0_33] : memref<1x32x128xf32, #tpu.memory_space<vmem>>, vector<1x8x128xf32>
      %46 = vector.shape_cast %45 : vector<1x8x128xf32> to vector<8x128xf32>
      %47 = vector.shape_cast %41 : vector<8x128xf32> to vector<1x8x128xf32>
      tpu.vector_store %arg6[%c0_31, %c8_32, %c0_33], %47 {strides = array<i32>} : memref<1x32x128xf32, #tpu.memory_space<vmem>>, vector<1x8x128xf32>,
      %c0_34 = arith.constant 0 : index
      %c8_35 = arith.constant 8 : index
      %c0_36 = arith.constant 0 : index
      %48 = vector.load %arg7[%c0_34, %c8_35, %c0_36] : memref<1x32x128xf32, #tpu.memory_space<vmem>>, vector<1x8x128xf32>
      %49 = vector.shape_cast %48 : vector<1x8x128xf32> to vector<8x128xf32>
      %50 = vector.shape_cast %44 : vector<8x128xf32> to vector<1x8x128xf32>
      tpu.vector_store %arg7[%c0_34, %c8_35, %c0_36], %50 {strides = array<i32>} : memref<1x32x128xf32, #tpu.memory_space<vmem>>, vector<1x8x128xf32>,
      %c0_37 = arith.constant 0 : index
      %c16 = arith.constant 16 : index
      %c0_38 = arith.constant 0 : index
      %51 = vector.load %arg6[%c0_37, %c16, %c0_38] : memref<1x32x128xf32, #tpu.memory_space<vmem>>, vector<1x8x128xf32>
      %52 = vector.shape_cast %51 : vector<1x8x128xf32> to vector<8x128xf32>
      %c0_39 = arith.constant 0 : index
      %c16_40 = arith.constant 16 : index
      %c0_41 = arith.constant 0 : index
      %53 = vector.load %arg7[%c0_39, %c16_40, %c0_41] : memref<1x32x128xf32, #tpu.memory_space<vmem>>, vector<1x8x128xf32>
      %54 = vector.shape_cast %53 : vector<1x8x128xf32> to vector<8x128xf32>
      %c0_42 = arith.constant 0 : index
      %c16_43 = arith.constant 16 : index
      %c0_44 = arith.constant 0 : index
      %55 = vector.load %arg2[%c0_42, %c16_43, %c0_44] : memref<1x32x128xf32, #tpu.memory_space<vmem>>, vector<1x8x128xf32>
      %56 = vector.shape_cast %55 : vector<1x8x128xf32> to vector<8x128xf32>
      %cst_45 = arith.constant 0.000000e+00 : f32
      %57 = vector.broadcast %cst_45 : f32 to vector<8x128xf32>
      %58 = arith.select %14, %56, %57 : vector<8x128xi1>, vector<8x128xf32>
      %59 = arith.addf %52, %58 : vector<8x128xf32>
      %cst_46 = arith.constant 0xFF800000 : f32
      %60 = vector.broadcast %cst_46 : f32 to vector<8x128xf32>
      %61 = arith.select %14, %56, %60 : vector<8x128xi1>, vector<8x128xf32>
      %62 = arith.maximumf %54, %61 : vector<8x128xf32>
      %c0_47 = arith.constant 0 : index
      %c16_48 = arith.constant 16 : index
      %c0_49 = arith.constant 0 : index
      %63 = vector.load %arg6[%c0_47, %c16_48, %c0_49] : memref<1x32x128xf32, #tpu.memory_space<vmem>>, vector<1x8x128xf32>
      %64 = vector.shape_cast %63 : vector<1x8x128xf32> to vector<8x128xf32>
      %65 = vector.shape_cast %59 : vector<8x128xf32> to vector<1x8x128xf32>
      tpu.vector_store %arg6[%c0_47, %c16_48, %c0_49], %65 {strides = array<i32>} : memref<1x32x128xf32, #tpu.memory_space<vmem>>, vector<1x8x128xf32>,
      %c0_50 = arith.constant 0 : index
      %c16_51 = arith.constant 16 : index
      %c0_52 = arith.constant 0 : index
      %66 = vector.load %arg7[%c0_50, %c16_51, %c0_52] : memref<1x32x128xf32, #tpu.memory_space<vmem>>, vector<1x8x128xf32>
      %67 = vector.shape_cast %66 : vector<1x8x128xf32> to vector<8x128xf32>
      %68 = vector.shape_cast %62 : vector<8x128xf32> to vector<1x8x128xf32>
      tpu.vector_store %arg7[%c0_50, %c16_51, %c0_52], %68 {strides = array<i32>} : memref<1x32x128xf32, #tpu.memory_space<vmem>>, vector<1x8x128xf32>,
      %c0_53 = arith.constant 0 : index
      %c24 = arith.constant 24 : index
      %c0_54 = arith.constant 0 : index
      %69 = vector.load %arg6[%c0_53, %c24, %c0_54] : memref<1x32x128xf32, #tpu.memory_space<vmem>>, vector<1x8x128xf32>
      %70 = vector.shape_cast %69 : vector<1x8x128xf32> to vector<8x128xf32>
      %c0_55 = arith.constant 0 : index
      %c24_56 = arith.constant 24 : index
      %c0_57 = arith.constant 0 : index
      %71 = vector.load %arg7[%c0_55, %c24_56, %c0_57] : memref<1x32x128xf32, #tpu.memory_space<vmem>>, vector<1x8x128xf32>
      %72 = vector.shape_cast %71 : vector<1x8x128xf32> to vector<8x128xf32>
      %c0_58 = arith.constant 0 : index
      %c24_59 = arith.constant 24 : index
      %c0_60 = arith.constant 0 : index
      %73 = vector.load %arg2[%c0_58, %c24_59, %c0_60] : memref<1x32x128xf32, #tpu.memory_space<vmem>>, vector<1x8x128xf32>
      %74 = vector.shape_cast %73 : vector<1x8x128xf32> to vector<8x128xf32>
      %cst_61 = arith.constant 0.000000e+00 : f32
      %75 = vector.broadcast %cst_61 : f32 to vector<8x128xf32>
      %76 = arith.select %14, %74, %75 : vector<8x128xi1>, vector<8x128xf32>
      %77 = arith.addf %70, %76 : vector<8x128xf32>
      %cst_62 = arith.constant 0xFF800000 : f32
      %78 = vector.broadcast %cst_62 : f32 to vector<8x128xf32>
      %79 = arith.select %14, %74, %78 : vector<8x128xi1>, vector<8x128xf32>
      %80 = arith.maximumf %72, %79 : vector<8x128xf32>
      %c0_63 = arith.constant 0 : index
      %c24_64 = arith.constant 24 : index
      %c0_65 = arith.constant 0 : index
      %81 = vector.load %arg6[%c0_63, %c24_64, %c0_65] : memref<1x32x128xf32, #tpu.memory_space<vmem>>, vector<1x8x128xf32>
      %82 = vector.shape_cast %81 : vector<1x8x128xf32> to vector<8x128xf32>
      %83 = vector.shape_cast %77 : vector<8x128xf32> to vector<1x8x128xf32>
      tpu.vector_store %arg6[%c0_63, %c24_64, %c0_65], %83 {strides = array<i32>} : memref<1x32x128xf32, #tpu.memory_space<vmem>>, vector<1x8x128xf32>,
      %c0_66 = arith.constant 0 : index
      %c24_67 = arith.constant 24 : index
      %c0_68 = arith.constant 0 : index
      %84 = vector.load %arg7[%c0_66, %c24_67, %c0_68] : memref<1x32x128xf32, #tpu.memory_space<vmem>>, vector<1x8x128xf32>
      %85 = vector.shape_cast %84 : vector<1x8x128xf32> to vector<8x128xf32>
      %86 = vector.shape_cast %80 : vector<8x128xf32> to vector<1x8x128xf32>
      tpu.vector_store %arg7[%c0_66, %c24_67, %c0_68], %86 {strides = array<i32>} : memref<1x32x128xf32, #tpu.memory_space<vmem>>, vector<1x8x128xf32>,
    } else {
    }
    %c2_i32_4 = arith.constant 2 : i32
    %9 = arith.cmpi eq, %arg1, %c2_i32_4 : i32
    %10 = arith.extui %9 : i1 to i32
    %c0_i32_5 = arith.constant 0 : i32
    %11 = arith.cmpi ne, %10, %c0_i32_5 : i32
    scf.if %11 {
      %c0 = arith.constant 0 : index
      %c0_6 = arith.constant 0 : index
      %c0_7 = arith.constant 0 : index
      %12 = vector.load %arg6[%c0, %c0_6, %c0_7] : memref<1x32x128xf32, #tpu.memory_space<vmem>>, vector<1x32x128xf32>
      %cst = arith.constant dense<0.000000e+00> : vector<1x32xf32>
      %13 = vector.multi_reduction <add>, %12, %cst [2] : vector<1x32x128xf32> to vector<1x32xf32>
      %cst_8 = arith.constant 0.00308641978 : f32
      %14 = vector.broadcast %cst_8 : f32 to vector<1x32xf32>
      %15 = arith.mulf %13, %14 : vector<1x32xf32>
      %c0_9 = arith.constant 0 : index
      %c0_10 = arith.constant 0 : index
      %c0_11 = arith.constant 0 : index
      %16 = vector.load %arg7[%c0_9, %c0_10, %c0_11] : memref<1x32x128xf32, #tpu.memory_space<vmem>>, vector<1x32x128xf32>
      %cst_12 = arith.constant dense<0xFF800000> : vector<1x32xf32>
      %17 = vector.multi_reduction <maximumf>, %16, %cst_12 [2] : vector<1x32x128xf32> to vector<1x32xf32>
      %18 = tpu.concatenate %15, %17 in 0 : vector<1x32xf32>, vector<1x32xf32> -> vector<2x32xf32>
      %c0_13 = arith.constant 0 : index
      %c0_14 = arith.constant 0 : index
      %19 = vector.load %arg3[%c0_13, %c0_14] : memref<32x2xf32, #tpu.memory_space<vmem>>, vector<32x2xf32>
      %c0_15 = arith.constant 0 : index
      %c0_16 = arith.constant 0 : index
      %20 = vector.load %arg4[%c0_15, %c0_16] : memref<2x32xf32, #tpu.memory_space<vmem>>, vector<2x32xf32>
      %cst_17 = arith.constant dense<0.000000e+00> : vector<2x2xf32>
      %21 = tpu.matmul %18, %19, %cst_17 {dimension_numbers = #tpu.dot_dimension_numbers<[1], [0], [0], [1], [0, 0, 1, 1], [], []>} : vector<2x32xf32>, vector<32x2xf32>, vector<2x2xf32> -> vector<2x2xf32>
      %cst_18 = arith.constant 0.000000e+00 : f32
      %22 = vector.broadcast %cst_18 : f32 to vector<2x2xf32>
      %23 = arith.maximumf %21, %22 : vector<2x2xf32>
      %cst_19 = arith.constant dense<0.000000e+00> : vector<2x32xf32>
      %24 = tpu.matmul %23, %20, %cst_19 {dimension_numbers = #tpu.dot_dimension_numbers<[1], [0], [0], [1], [0, 0, 1, 1], [], []>} : vector<2x2xf32>, vector<2x32xf32>, vector<2x32xf32> -> vector<2x32xf32>
      %25 = vector.extract_strided_slice %24 {offsets = [0, 0], sizes = [1, 32], strides = [1, 1]} : vector<2x32xf32> to vector<1x32xf32>
      %26 = vector.extract_strided_slice %24 {offsets = [1, 0], sizes = [1, 32], strides = [1, 1]} : vector<2x32xf32> to vector<1x32xf32>
      %27 = arith.addf %25, %26 : vector<1x32xf32>
      %28 = arith.negf %27 : vector<1x32xf32>
      %29 = math.exp %28 : vector<1x32xf32>
      %cst_20 = arith.constant 1.000000e+00 : f32
      %30 = vector.broadcast %cst_20 : f32 to vector<1x32xf32>
      %31 = arith.addf %30, %29 : vector<1x32xf32>
      %32 = arith.divf %30, %31 : vector<1x32xf32>
      %33 = vector.shape_cast %32 : vector<1x32xf32> to vector<1x32x1xf32>
      %c0_21 = arith.constant 0 : index
      %c0_22 = arith.constant 0 : index
      %c0_23 = arith.constant 0 : index
      %34 = vector.load %arg5[%c0_21, %c0_22, %c0_23] : memref<1x32x1xf32, #tpu.memory_space<vmem>>, vector<1x32x1xf32>
      tpu.vector_store %arg5[%c0_21, %c0_22, %c0_23], %33 {strides = array<i32>} : memref<1x32x1xf32, #tpu.memory_space<vmem>>, vector<1x32x1xf32>,
    } else {
    }
    return
  }
  func.func @transform_0(%arg0: i32, %arg1: i32) -> (i32, i32, i32) {
    %c0_i32 = arith.constant 0 : i32
    %c0_i32_0 = arith.constant 0 : i32
    return %arg0, %c0_i32, %arg1 : i32, i32, i32
  }
  func.func @transform_1(%arg0: i32, %arg1: i32) -> (i32, i32) {
    %c0_i32 = arith.constant 0 : i32
    %c0_i32_0 = arith.constant 0 : i32
    %c0_i32_1 = arith.constant 0 : i32
    return %c0_i32, %c0_i32_0 : i32, i32
  }
  func.func @transform_2(%arg0: i32, %arg1: i32) -> (i32, i32) {
    %c0_i32 = arith.constant 0 : i32
    %c0_i32_0 = arith.constant 0 : i32
    %c0_i32_1 = arith.constant 0 : i32
    return %c0_i32, %c0_i32_0 : i32, i32
  }
  func.func @transform_3(%arg0: i32, %arg1: i32) -> (i32, i32, i32) {
    %c0_i32 = arith.constant 0 : i32
    %c0_i32_0 = arith.constant 0 : i32
    %c0_i32_1 = arith.constant 0 : i32
    return %arg0, %c0_i32, %c0_i32_0 : i32, i32, i32
  }
}

</mosaic_0001>

<llo_original>
// kernel: tpu_custom_call.1
$region0: #{tpu_custom_call.1}
  #allocation0 [shape = 'u32[]', space=smem, size = 0x4, offset = 0x4, fixed_abs, tag = 'smem constant byte address 0x4 - core index']
  #allocation1 [shape = 'u32[144,128]{1,0:T(1,128)}', space=vmem, size = 0x12000, scoped, tag = 'internal scratch']
  #allocation2 [shape = 'f32[1,32,128]{2,1,0:T(8,128)}', space=vmem, size = 0x4000, scoped, tag = 'scratch operand']
  #allocation3 [shape = 'f32[1,32,128]{2,1,0:T(8,128)}', space=vmem, size = 0x4000, scoped, tag = 'scratch operand']
  %s0 = inlined_call_operand.hbm [shape: f32[2,32,324], index: 0, kind: input, shape index: {}]
  %s1 = inlined_call_operand.vmem [shape: f32[32,2], index: 1, kind: input, shape index: {}]
  %s2 = inlined_call_operand.vmem [shape: f32[2,32], index: 2, kind: input, shape index: {}]
  %s3 = inlined_call_operand.vmem [shape: f32[2,32,1], index: 3, kind: output, shape index: {}]
  %s4 = sld [smem:[#allocation0]]
  $region61: #{tpu_custom_call.1} parent=0
    _
  %s6 = ssub.s32 1, %s4
  %s7 = scalar_select 0, %s6, %s4
  $region1: #{tpu_custom_call.1} parent=0
    #allocation4 [shape = 'u8[32768]{0}', space=vmem, size = 0x8000, scoped, tag = 'input window, operand 0']
    #allocation5 [shape = 's32[2]{0}', space=sflag, size = 0x8, scoped, tag = 'scoped memory for tpu_custom_call.1']
    %8 = vsyncpa [#allocation5], 0
    %s9 = scalar_lea.sflag [#allocation5], 1
    %10 = vsyncpa %s9, 0
    loop: start=0, step=1, limit=8
    $region2: #{tpu_custom_call.1} parent=1 // loop_pre_header
      _
    $region3: #{tpu_custom_call.1} parent=1 // loop_header
      %s12 = sphi 0, %s16
      %p13 = scmp.ge.s32.totalorder %s12, 8
      %s19 = sphi 0, %s31
      %s20 = sphi 0, %s27
      %s21 = sphi 0, %s19
      %s22 = sphi 0, %s20
      %s23 = sphi 0, %s21
      %s24 = sphi 0, %s22
      %s36 = sphi 0, %s38
      %s39 = sphi 0, %s36
      %s40 = sphi 0, %s39
      %s56 = sphi 0, %s40
      %s60 = sphi 0, %s60
      %s62 = sphi 0, %s60
      %s63 = sphi 0, %s62
      %s77 = sphi 0, %s63
      %s81 = sphi 0, %s81
      %s83 = sphi 0, %s81
      %s84 = sphi 0, %s83
      %s98 = sphi 0, %s84
      %s104 = sphi 0, %s106
      %s107 = sphi 0, %s104
      %s108 = sphi 0, %s107
      %s124 = sphi 0, %s108
    $region4: #{tpu_custom_call.1} parent=1 // loop_header_branch
      %15 = sbr.rel (%p13) target = $region8
    $region5: #{tpu_custom_call.1} parent=1 // loop_body
      %s17 = ssub.s32 %s12, 1
      %s18 = ssub.s32 %s12, 2
      %s25 = sadd.s32 1, %s20
      %p26 = scmp.ge.s32.totalorder %s25, 3
      %s27 = scalar_select %p26, 0, %s25
      %s28 = sadd.s32 1, %s19
      %s29 = scalar_select %p26, %s28, %s19
      %p30 = scmp.ge.s32.totalorder %s29, 2
      %s31 = scalar_select %p30, 0, %s29
      %s32 = ssub.s32 %s19, %s31
      %s33 = ssub.s32 %s20, %s27
      %s34 = sor.u32 %s32, %s33
      %p35 = scmp.eq.s32.totalorder %s34, 0
      %s37 = sadd.s32 %s36, 1
      %s38 = scalar_select %p35, %s36, %s37
      %p41 = pneg %p35
      %p42 = scmp.eq.s32.totalorder %s12, 5
      %p43 = por %p41, %p42
      %p44 = scmp.ne.s32.totalorder %s36, %s39
      %p45 = scmp.eq.s32.totalorder %s12, 0
      %p46 = por %p44, %p45
      %p47 = scmp.ne.s32.totalorder %s36, %s39
      %p48 = scmp.eq.s32.totalorder %s17, 5
      %p49 = por %p47, %p48
      %p50 = scmp.ne.s32.totalorder %s39, %s40
      %p51 = scmp.eq.s32.totalorder %s17, 0
      %p52 = por %p50, %p51
      %p53 = scmp.ne.s32.totalorder %s39, %s40
      %p54 = scmp.eq.s32.totalorder %s18, 5
      %p55 = por %p53, %p54
      %p57 = scmp.ne.s32.totalorder %s40, %s56
      %p58 = scmp.eq.s32.totalorder %s18, 0
      %p59 = por %p57, %p58
      %s61 = sadd.s32 %s60, 1
      %p64 = scmp.eq.s32.totalorder %s12, 5
      %p65 = scmp.ne.s32.totalorder %s60, %s62
      %p66 = scmp.eq.s32.totalorder %s12, 0
      %p67 = por %p65, %p66
      %p68 = scmp.ne.s32.totalorder %s60, %s62
      %p69 = scmp.eq.s32.totalorder %s17, 5
      %p70 = por %p68, %p69
      %p71 = scmp.ne.s32.totalorder %s62, %s63
      %p72 = scmp.eq.s32.totalorder %s17, 0
      %p73 = por %p71, %p72
      %p74 = scmp.ne.s32.totalorder %s62, %s63
      %p75 = scmp.eq.s32.totalorder %s18, 5
      %p76 = por %p74, %p75
      %p78 = scmp.ne.s32.totalorder %s63, %s77
      %p79 = scmp.eq.s32.totalorder %s18, 0
      %p80 = por %p78, %p79
      %s82 = sadd.s32 %s81, 1
      %p85 = scmp.eq.s32.totalorder %s12, 5
      %p86 = scmp.ne.s32.totalorder %s81, %s83
      %p87 = scmp.eq.s32.totalorder %s12, 0
      %p88 = por %p86, %p87
      %p89 = scmp.ne.s32.totalorder %s81, %s83
      %p90 = scmp.eq.s32.totalorder %s17, 5
      %p91 = por %p89, %p90
      %p92 = scmp.ne.s32.totalorder %s83, %s84
      %p93 = scmp.eq.s32.totalorder %s17, 0
      %p94 = por %p92, %p93
      %p95 = scmp.ne.s32.totalorder %s83, %s84
      %p96 = scmp.eq.s32.totalorder %s18, 5
      %p97 = por %p95, %p96
      %p99 = scmp.ne.s32.totalorder %s84, %s98
      %p100 = scmp.eq.s32.totalorder %s18, 0
      %p101 = por %p99, %p100
      %s102 = ssub.s32 %s19, %s31
      %p103 = scmp.eq.s32.totalorder %s102, 0
      %s105 = sadd.s32 %s104, 1
      %s106 = scalar_select %p103, %s104, %s105
      %p109 = pneg %p103
      %p110 = scmp.eq.s32.totalorder %s12, 5
      %p111 = por %p109, %p110
      %p112 = scmp.ne.s32.totalorder %s104, %s107
      %p113 = scmp.eq.s32.totalorder %s12, 0
      %p114 = por %p112, %p113
      %p115 = scmp.ne.s32.totalorder %s104, %s107
      %p116 = scmp.eq.s32.totalorder %s17, 5
      %p117 = por %p115, %p116
      %p118 = scmp.ne.s32.totalorder %s107, %s108
      %p119 = scmp.eq.s32.totalorder %s17, 0
      %p120 = por %p118, %p119
      %p121 = scmp.ne.s32.totalorder %s107, %s108
      %p122 = scmp.eq.s32.totalorder %s18, 5
      %p123 = por %p121, %p122
      %p125 = scmp.ne.s32.totalorder %s108, %s124
      %p126 = scmp.eq.s32.totalorder %s18, 0
      %p127 = por %p125, %p126
      %p128 = scmp.le.s32.totalorder 1, %s12
      %p129 = scmp.lt.s32.totalorder %s12, 7
      %p130 = pnand %p128, %p129
      %p131 = pneg %p130
      // Predicated region
      $region9: #{tpu_custom_call.1} parent=5 // pred_check
        _
      $region10: #{tpu_custom_call.1} parent=5 // pred_check_branch
        %133 = sbr.rel (%p130) target = $region12
      $region11: #{tpu_custom_call.1} parent=5 // pred_region
        %s134 = ssub.s32 %s12, 1
        // Predicated region
        $region13: #{tpu_custom_call.1} parent=11 // pred_check
          %p135 = pneg %p73
        $region14: #{tpu_custom_call.1} parent=11 // pred_check_branch
          %137 = sbr.rel (%p135) target = $region16
        $region15: #{tpu_custom_call.1} parent=11 // pred_region
          _
        $region16: #{tpu_custom_call.1} parent=11 // pred_fallthru
          _
        // Predicated region
        $region17: #{tpu_custom_call.1} parent=11 // pred_check
          %p138 = pneg %p94
        $region18: #{tpu_custom_call.1} parent=11 // pred_check_branch
          %140 = sbr.rel (%p138) target = $region20
        $region19: #{tpu_custom_call.1} parent=11 // pred_region
          _
        $region20: #{tpu_custom_call.1} parent=11 // pred_fallthru
          _
      $region12: #{tpu_custom_call.1} parent=5 // pred_fallthru
        _
      %p141 = scmp.lt.s32.totalorder %s12, 6
      // Predicated region
      $region21: #{tpu_custom_call.1} parent=5 // pred_check
        %p142 = pneg %p141
      $region22: #{tpu_custom_call.1} parent=5 // pred_check_branch
        %144 = sbr.rel (%p142) target = $region24
      $region23: #{tpu_custom_call.1} parent=5 // pred_region
        // Predicated region
        $region25: #{tpu_custom_call.1} parent=23 // pred_check
          %p145 = pneg %p46
        $region26: #{tpu_custom_call.1} parent=23 // pred_check_branch
          %147 = sbr.rel (%p145) target = $region28
        $region27: #{tpu_custom_call.1} parent=23 // pred_region
          %s148 = sand.u32 %s36, 1
          %s149 = scalar_lea.sflag [#allocation5], %s148
          %s150 = sand.u32 %s36, 1
          %s151 = smul.addr %s150, 32
          %s152 = scalar_lea.vmem [#allocation4], %s151
          %s154 = ssub.s32 512, 512
          %155 = vsyncadd %s149, %s154
          %s156 = smul.addr %s19, 12
          %s157 = sadd.s32 %s20, %s156
          %s158 = smul.addr %s157, 128
          %s159 = scalar_lea.hbm %s0, %s158
          %s160 = sshll.u32 %s152, 4
          %s161 = int_to_ptr.vmem [resolvable:$true] %s160
          %166 = dma.hbm_to_vmem [thread:$0]  %s159, 512, %s161, %s149, 384, 128, 8
        $region28: #{tpu_custom_call.1} parent=23 // pred_fallthru
          _
      $region24: #{tpu_custom_call.1} parent=5 // pred_fallthru
        _
      %p167 = scmp.le.s32.totalorder 1, %s12
      %p168 = scmp.lt.s32.totalorder %s12, 7
      %p169 = pnand %p167, %p168
      %p170 = pneg %p169
      // Predicated region
      $region29: #{tpu_custom_call.1} parent=5 // pred_check
        _
      $region30: #{tpu_custom_call.1} parent=5 // pred_check_branch
        %172 = sbr.rel (%p169) target = $region32
      $region31: #{tpu_custom_call.1} parent=5 // pred_region
        %s173 = ssub.s32 %s12, 1
        %s174 = sand.u32 %s39, 1
        %s175 = scalar_lea.sflag [#allocation5], %s174
        %s176 = sand.u32 %s39, 1
        %s177 = smul.addr %s176, 32
        %s178 = scalar_lea.vmem [#allocation4], %s177
        // Predicated region
        $region33: #{tpu_custom_call.1} parent=31 // pred_check
          %p179 = pneg %p52
        $region34: #{tpu_custom_call.1} parent=31 // pred_check_branch
          %181 = sbr.rel (%p179) target = $region36
        $region35: #{tpu_custom_call.1} parent=31 // pred_region
          %182 = dma.done %s175, 512
        $region36: #{tpu_custom_call.1} parent=31 // pred_fallthru
          _
        %s183 = sand.u32 %s39, 1
        %s184 = scalar_lea.sflag [#allocation5], %s183
        %s185 = sand.u32 %s39, 1
        %s186 = smul.addr %s185, 32
        %s187 = scalar_lea.vmem [#allocation4], %s186
        %p188 = pneg %p52
        %p189 = pneg %p49
        %p190 = pneg %p73
        %p191 = pneg %p70
        %p192 = pneg %p94
        %p193 = pneg %p91
        %p194 = pneg %p120
        %p195 = pneg %p117
        %p196 = scmp.lt.s32.totalorder %s21, 1
        %s197 = scalar_select %p196, %s21, 1
        %s198 = smul.addr %s197, 4
        %s199 = smul.addr %s198, 8
        %s200 = scalar_lea.vmem %s3, %s199
        %p201 = scmp.lt.s32.totalorder %s21, 1
        %s202 = scalar_select %p201, %s21, 1
        %s203 = smul.addr %s202, 4
        %s204 = smul.addr %s203, 8
        %s205 = scalar_lea.vmem %s3, %s204
        %p206 = scmp.eq.s32.totalorder %s22, 0
        // Predicated region
        $region37: #{tpu_custom_call.1} parent=31 // pred_check
          %p207 = pneg %p206
        $region38: #{tpu_custom_call.1} parent=31 // pred_check_branch
          %209 = sbr.rel (%p207) target = $region40
        $region39: #{tpu_custom_call.1} parent=31 // pred_region
          %210 = vst [vmem:[#allocation2] sm:$0xff] 0.0
          %211 = vst [vmem:[#allocation2 + $0x8] sm:$0xff] 0.0
          %212 = vst [vmem:[#allocation2 + $0x10] sm:$0xff] 0.0
          %213 = vst [vmem:[#allocation2 + $0x18] sm:$0xff] 0.0
          %214 = vst [vmem:[#allocation3] sm:$0xff] -inf
          %215 = vst [vmem:[#allocation3 + $0x8] sm:$0xff] -inf
          %216 = vst [vmem:[#allocation3 + $0x10] sm:$0xff] -inf
          %217 = vst [vmem:[#allocation3 + $0x18] sm:$0xff] -inf
        $region40: #{tpu_custom_call.1} parent=31 // pred_fallthru
          _
        %p218 = scmp.lt.s32.totalorder %s22, 2
        // Predicated region
        $region41: #{tpu_custom_call.1} parent=31 // pred_check
          %p219 = pneg %p218
        $region42: #{tpu_custom_call.1} parent=31 // pred_check_branch
          %221 = sbr.rel (%p219) target = $region44
        $region43: #{tpu_custom_call.1} parent=31 // pred_region
          %v222 = vld [vmem:[#allocation2] sm:$0xff]
          %v223 = vld [vmem:[#allocation3] sm:$0xff]
          %v224 = vld [vmem:[%s178] sm:$0xff]
          %v225 = vadd.f32 %v222, %v224
          %v226 = vmax.f32 %v223, %v224
          %227 = vst [vmem:[#allocation2] sm:$0xff] %v225
          %228 = vst [vmem:[#allocation3] sm:$0xff] %v226
          %v229 = vld [vmem:[#allocation2 + $0x8] sm:$0xff]
          %v230 = vld [vmem:[#allocation3 + $0x8] sm:$0xff]
          %v231 = vld [vmem:[%s178 + $0x8] sm:$0xff]
          %v232 = vadd.f32 %v229, %v231
          %v233 = vmax.f32 %v230, %v231
          %234 = vst [vmem:[#allocation2 + $0x8] sm:$0xff] %v232
          %235 = vst [vmem:[#allocation3 + $0x8] sm:$0xff] %v233
          %v236 = vld [vmem:[#allocation2 + $0x10] sm:$0xff]
          %v237 = vld [vmem:[#allocation3 + $0x10] sm:$0xff]
          %v238 = vld [vmem:[%s178 + $0x10] sm:$0xff]
          %v239 = vadd.f32 %v236, %v238
          %v240 = vmax.f32 %v237, %v238
          %241 = vst [vmem:[#allocation2 + $0x10] sm:$0xff] %v239
          %242 = vst [vmem:[#allocation3 + $0x10] sm:$0xff] %v240
          %v243 = vld [vmem:[#allocation2 + $0x18] sm:$0xff]
          %v244 = vld [vmem:[#allocation3 + $0x18] sm:$0xff]
          %v245 = vld [vmem:[%s178 + $0x18] sm:$0xff]
          %v246 = vadd.f32 %v243, %v245
          %v247 = vmax.f32 %v244, %v245
          %248 = vst [vmem:[#allocation2 + $0x18] sm:$0xff] %v246
          %249 = vst [vmem:[#allocation3 + $0x18] sm:$0xff] %v247
        $region44: #{tpu_custom_call.1} parent=31 // pred_fallthru
          _
        %p250 = scmp.eq.s32.totalorder %s22, 2
        // Predicated region
        $region45: #{tpu_custom_call.1} parent=31 // pred_check
          %p251 = pneg %p250
        $region46: #{tpu_custom_call.1} parent=31 // pred_check_branch
          %253 = sbr.rel (%p251) target = $region48
        $region47: #{tpu_custom_call.1} parent=31 // pred_region
          %v254 = vlaneseq
          %v255 = vand.u32 %v254, 127
          %vm256 = vcmp.lt.s32.totalorder %v255, 68
          %v257 = vld [vmem:[#allocation2] sm:$0xff]
          %v258 = vld [vmem:[#allocation3] sm:$0xff]
          %v259 = vld [vmem:[%s178] sm:$0xff]
          %v260 = vsel %vm256, %v259, 0.0
          %v261 = vadd.f32 %v257, %v260
          %v262 = vsel %vm256, %v259, -inf
          %v263 = vmax.f32 %v258, %v262
          %264 = vst [vmem:[#allocation2] sm:$0xff] %v261
          %265 = vst [vmem:[#allocation3] sm:$0xff] %v263
          %v266 = vld [vmem:[#allocation2 + $0x8] sm:$0xff]
          %v267 = vld [vmem:[#allocation3 + $0x8] sm:$0xff]
          %v268 = vld [vmem:[%s178 + $0x8] sm:$0xff]
          %v269 = vsel %vm256, %v268, 0.0
          %v270 = vadd.f32 %v266, %v269
          %v271 = vsel %vm256, %v268, -inf
          %v272 = vmax.f32 %v267, %v271
          %273 = vst [vmem:[#allocation2 + $0x8] sm:$0xff] %v270
          %274 = vst [vmem:[#allocation3 + $0x8] sm:$0xff] %v272
          %v275 = vld [vmem:[#allocation2 + $0x10] sm:$0xff]
          %v276 = vld [vmem:[#allocation3 + $0x10] sm:$0xff]
          %v277 = vld [vmem:[%s178 + $0x10] sm:$0xff]
          %v278 = vsel %vm256, %v277, 0.0
          %v279 = vadd.f32 %v275, %v278
          %v280 = vsel %vm256, %v277, -inf
          %v281 = vmax.f32 %v276, %v280
          %282 = vst [vmem:[#allocation2 + $0x10] sm:$0xff] %v279
          %283 = vst [vmem:[#allocation3 + $0x10] sm:$0xff] %v281
          %v284 = vld [vmem:[#allocation2 + $0x18] sm:$0xff]
          %v285 = vld [vmem:[#allocation3 + $0x18] sm:$0xff]
          %v286 = vld [vmem:[%s178 + $0x18] sm:$0xff]
          %v287 = vsel %vm256, %v286, 0.0
          %v288 = vadd.f32 %v284, %v287
          %v289 = vsel %vm256, %v286, -inf
          %v290 = vmax.f32 %v285, %v289
          %291 = vst [vmem:[#allocation2 + $0x18] sm:$0xff] %v288
          %292 = vst [vmem:[#allocation3 + $0x18] sm:$0xff] %v290
          %v293 = vld [vmem:[#allocation2] sm:$0xff]
          %v294 = vld [vmem:[#allocation2 + $0x8] sm:$0xff]
          %v295 = vld [vmem:[#allocation2 + $0x10] sm:$0xff]
          %v296 = vld [vmem:[#allocation2 + $0x18] sm:$0xff]
          %297 = vadd.xlane.f32.xlu0 %v293
          %v298 = vpop.xlane.xlu0 %297
          %299 = vadd.xlane.f32.xlu0 %v294
          %v300 = vpop.xlane.xlu0 %299
          %301 = vadd.xlane.f32.xlu0 %v295
          %v302 = vpop.xlane.xlu0 %301
          %303 = vadd.xlane.f32.xlu0 %v296
          %v304 = vpop.xlane.xlu0 %303
          %v305 = vmul.f32 %v298, 0.0030864198
          %v306 = vmul.f32 %v300, 0.0030864198
          %v307 = vmul.f32 %v302, 0.0030864198
          %v308 = vmul.f32 %v304, 0.0030864198
          %v309 = vld [vmem:[#allocation3] sm:$0xff]
          %v310 = vld [vmem:[#allocation3 + $0x8] sm:$0xff]
          %v311 = vld [vmem:[#allocation3 + $0x10] sm:$0xff]
          %v312 = vld [vmem:[#allocation3 + $0x18] sm:$0xff]
          %313 = vmax.xlane.f32.xlu0 %v309
          %v314 = vpop.xlane.xlu0 %313
          %315 = vmax.xlane.f32.xlu0 %v310
          %v316 = vpop.xlane.xlu0 %315
          %317 = vmax.xlane.f32.xlu0 %v311
          %v318 = vpop.xlane.xlu0 %317
          %319 = vmax.xlane.f32.xlu0 %v312
          %v320 = vpop.xlane.xlu0 %319
          %v325 = vlaneseq
          %v326 = vshrl.u32 %v325, 7
          %v327 = vsub.s32 %v255, %v326
          %v328 = vrot.slane %v305, %v327
          %v329 = vadd.s32 %v255, 4294967288
          %v330 = vlaneseq
          %v331 = vshrl.u32 %v330, 7
          %v332 = vsub.s32 %v329, %v331
          %v333 = vrot.slane %v306, %v332
          %vm334 = vcmask 130112
          %v335 = vsel %vm334, %v333, %v328
          %v336 = vadd.s32 %v255, 4294967280
          %v337 = vlaneseq
          %v338 = vshrl.u32 %v337, 7
          %v339 = vsub.s32 %v336, %v338
          %v340 = vrot.slane %v307, %v339
          %vm341 = vcmask 195712
          %v342 = vsel %vm341, %v340, %v335
          %v343 = vadd.s32 %v255, 4294967272
          %v344 = vlaneseq
          %v345 = vshrl.u32 %v344, 7
          %v346 = vsub.s32 %v343, %v345
          %v347 = vrot.slane %v308, %v346
          %vm348 = vcmask 261312
          %v349 = vsel %vm348, %v347, %v342
          %v355 = vlaneseq
          %v356 = vshrl.u32 %v355, 7
          %v357 = vsub.s32 %v255, %v356
          %v358 = vrot.slane %v314, %v357
          %v359 = vlaneseq
          %v360 = vshrl.u32 %v359, 7
          %v361 = vsub.s32 %v329, %v360
          %v362 = vrot.slane %v316, %v361
          %v363 = vsel %vm334, %v362, %v358
          %v364 = vlaneseq
          %v365 = vshrl.u32 %v364, 7
          %v366 = vsub.s32 %v336, %v365
          %v367 = vrot.slane %v318, %v366
          %v368 = vsel %vm341, %v367, %v363
          %v369 = vlaneseq
          %v370 = vshrl.u32 %v369, 7
          %v371 = vsub.s32 %v343, %v370
          %v372 = vrot.slane %v320, %v371
          %v373 = vsel %vm348, %v372, %v368
          %vm375 = vcmask 1040384
          %v376 = vsel %vm375, %v349, %v373
          %v377 = vld [vmem:[%s1] sm:$0xff]
          %v378 = vld [vmem:[%s1 + $0x8] sm:$0xff]
          %v379 = vld [vmem:[%s1 + $0x10] sm:$0xff]
          %v380 = vld [vmem:[%s1 + $0x18] sm:$0xff]
          %v381 = vld [vmem:[%s2] sm:$0x3]
          %vm382 = vcmask 261120
          %v384 = vsel %vm382, %v376, 0
          %386 = vmatprep.subr.mxu0 0.0
          %387 = vmatpush1.msra.mxu0 0.0
          %388 = vmatprep.subr.mxu0 0.0
          %389 = vmatpush1.msra.mxu0 0.0
          %390 = vmatprep.subr.mxu0 0.0
          %391 = vmatpush1.msra.mxu0 0.0
          %392 = vmatprep.subr.mxu0 0.0
          %393 = vmatpush1.msra.mxu0 0.0
          %394 = vmatprep.subr.mxu0 0.0
          %395 = vmatpush1.msra.mxu0 0.0
          %396 = vmatprep.subr.mxu0 0.0
          %397 = vmatpush1.msra.mxu0 0.0
          %398 = vmatprep.subr.mxu0 0.0
          %399 = vmatpush1.msra.mxu0 0.0
          %400 = vmatprep.subr.mxu0 0.0
          %401 = vmatpush1.msra.mxu0 0.0
          %402 = vmatprep.subr.mxu0 0.0
          %403 = vmatpush1.msra.mxu0 0.0
          %404 = vmatprep.subr.mxu0 0.0
          %405 = vmatpush1.msra.mxu0 0.0
          %406 = vmatprep.subr.mxu0 0.0
          %407 = vmatpush1.msra.mxu0 0.0
          %408 = vmatprep.subr.mxu0 0.0
          %409 = vmatpush1.msra.mxu0 0.0
          %410 = vmatprep.subr.mxu0 0.0
          %411 = vmatpush1.msra.mxu0 %v380
          %412 = vmatprep.subr.mxu0 0.0
          %413 = vmatpush1.msra.mxu0 %v379
          %414 = vmatprep.subr.mxu0 0.0
          %415 = vmatpush1.msra.mxu0 %v378
          %416 = vmatprep.subr.mxu0 0.0
          %417 = vmatpush1.msra.mxu0 %v377
          %418 = vmatprep.subr.mxu0 0.0
          %419 = vmatpush2.msra.mxu0 0.0
          %420 = vmatprep.subr.mxu0 0.0
          %421 = vmatpush2.msra.mxu0 0.0
          %422 = vmatprep.subr.mxu0 0.0
          %423 = vmatpush2.msra.mxu0 0.0
          %424 = vmatprep.subr.mxu0 0.0
          %425 = vmatpush2.msra.mxu0 0.0
          %426 = vmatprep.subr.mxu0 0.0
          %427 = vmatpush2.msra.mxu0 0.0
          %428 = vmatprep.subr.mxu0 0.0
          %429 = vmatpush2.msra.mxu0 0.0
          %430 = vmatprep.subr.mxu0 0.0
          %431 = vmatpush2.msra.mxu0 0.0
          %432 = vmatprep.subr.mxu0 0.0
          %433 = vmatpush2.msra.mxu0 0.0
          %434 = vmatprep.subr.mxu0 0.0
          %435 = vmatpush2.msra.mxu0 0.0
          %436 = vmatprep.subr.mxu0 0.0
          %437 = vmatpush2.msra.mxu0 0.0
          %438 = vmatprep.subr.mxu0 0.0
          %439 = vmatpush2.msra.mxu0 0.0
          %440 = vmatprep.subr.mxu0 0.0
          %441 = vmatpush2.msra.mxu0 0.0
          %442 = vmatprep.subr.mxu0 0.0
          %443 = vmatpush2.msra.mxu0 0.0
          %444 = vmatprep.subr.mxu0 0.0
          %445 = vmatpush2.msra.mxu0 0.0
          %446 = vmatprep.subr.mxu0 0.0
          %447 = vmatpush2.msra.mxu0 0.0
          %448 = vmatprep.subr.mxu0 0.0
          %449 = vmatpush2.msra.mxu0 0.0
          %450 = vmatprep.mubr.f32.mxu0 0.0
          %451 = vmatmul.mubr.f32.gmra.mxu0 %v384
          %v452 = vpop.f32.mrf.mxu0
          %v453 = vadd.f32 0.0, %v452
          %v454 = vpop.f32.mrf.mxu0
          %455 = vdwg.mxu0
          %v456 = vmax.f32 %v453, 0.0
          %vm457 = vcmask 15360
          %v459 = vsel %vm457, %v456, 0
          %vm461 = vcmask 1041408
          %v463 = vsel %vm461, %v381, 0
          %465 = vmatprep.subr.mxu0 0.0
          %466 = vmatpush1.msra.mxu0 0.0
          %467 = vmatprep.subr.mxu0 0.0
          %468 = vmatpush1.msra.mxu0 0.0
          %469 = vmatprep.subr.mxu0 0.0
          %470 = vmatpush1.msra.mxu0 0.0
          %471 = vmatprep.subr.mxu0 0.0
          %472 = vmatpush1.msra.mxu0 0.0
          %473 = vmatprep.subr.mxu0 0.0
          %474 = vmatpush1.msra.mxu0 0.0
          %475 = vmatprep.subr.mxu0 0.0
          %476 = vmatpush1.msra.mxu0 0.0
          %477 = vmatprep.subr.mxu0 0.0
          %478 = vmatpush1.msra.mxu0 0.0
          %479 = vmatprep.subr.mxu0 0.0
          %480 = vmatpush1.msra.mxu0 0.0
          %481 = vmatprep.subr.mxu0 0.0
          %482 = vmatpush1.msra.mxu0 0.0
          %483 = vmatprep.subr.mxu0 0.0
          %484 = vmatpush1.msra.mxu0 0.0
          %485 = vmatprep.subr.mxu0 0.0
          %486 = vmatpush1.msra.mxu0 0.0
          %487 = vmatprep.subr.mxu0 0.0
          %488 = vmatpush1.msra.mxu0 0.0
          %489 = vmatprep.subr.mxu0 0.0
          %490 = vmatpush1.msra.mxu0 0.0
          %491 = vmatprep.subr.mxu0 0.0
          %492 = vmatpush1.msra.mxu0 0.0
          %493 = vmatprep.subr.mxu0 0.0
          %494 = vmatpush1.msra.mxu0 0.0
          %495 = vmatprep.subr.mxu0 0.0
          %496 = vmatpush1.msra.mxu0 %v463
          %497 = vmatprep.subr.mxu0 0.0
          %498 = vmatpush2.msra.mxu0 0.0
          %499 = vmatprep.subr.mxu0 0.0
          %500 = vmatpush2.msra.mxu0 0.0
          %501 = vmatprep.subr.mxu0 0.0
          %502 = vmatpush2.msra.mxu0 0.0
          %503 = vmatprep.subr.mxu0 0.0
          %504 = vmatpush2.msra.mxu0 0.0
          %505 = vmatprep.subr.mxu0 0.0
          %506 = vmatpush2.msra.mxu0 0.0
          %507 = vmatprep.subr.mxu0 0.0
          %508 = vmatpush2.msra.mxu0 0.0
          %509 = vmatprep.subr.mxu0 0.0
          %510 = vmatpush2.msra.mxu0 0.0
          %511 = vmatprep.subr.mxu0 0.0
          %512 = vmatpush2.msra.mxu0 0.0
          %513 = vmatprep.subr.mxu0 0.0
          %514 = vmatpush2.msra.mxu0 0.0
          %515 = vmatprep.subr.mxu0 0.0
          %516 = vmatpush2.msra.mxu0 0.0
          %517 = vmatprep.subr.mxu0 0.0
          %518 = vmatpush2.msra.mxu0 0.0
          %519 = vmatprep.subr.mxu0 0.0
          %520 = vmatpush2.msra.mxu0 0.0
          %521 = vmatprep.subr.mxu0 0.0
          %522 = vmatpush2.msra.mxu0 0.0
          %523 = vmatprep.subr.mxu0 0.0
          %524 = vmatpush2.msra.mxu0 0.0
          %525 = vmatprep.subr.mxu0 0.0
          %526 = vmatpush2.msra.mxu0 0.0
          %527 = vmatprep.subr.mxu0 0.0
          %528 = vmatpush2.msra.mxu0 0.0
          %529 = vmatprep.mubr.f32.mxu0 0.0
          %530 = vmatmul.mubr.f32.gmra.mxu0 %v459
          %v531 = vpop.f32.mrf.mxu0
          %v532 = vadd.f32 0.0, %v531
          %v533 = vpop.f32.mrf.mxu0
          %534 = vdwg.mxu0
          %v536 = vrot.slane %v532, 1
          %v538 = vadd.f32 %v532, %v536
          %v539 = vxor.u32 %v538, 2147483648
          %v540 = vmul.f32 %v539, 1.442695
          %v541 = vpow.pop %v540
          %v542 = vadd.f32 %v541, 1.0
          %v543 = vrcp.pop %v542
          %v544 = vmul.f32 1.0, %v543
          %v545 = vlaneseq
          %v546 = vshrl.u32 %v545, 7
          %v547 = vsub.s32 0, %v546
          %v548 = vrot.slane %v544, %v547
          %550 = vbcast.lane.b32.xlu0 %v548, 256
          %v551 = vpop.permute.xlu0 %550
          %s553 = sor.u32 256, 8
          %554 = vbcast.lane.b32.xlu0 %v548, %s553
          %v555 = vpop.permute.xlu0 %554
          %s557 = sor.u32 256, 16
          %558 = vbcast.lane.b32.xlu0 %v548, %s557
          %v559 = vpop.permute.xlu0 %558
          %s561 = sor.u32 256, 24
          %562 = vbcast.lane.b32.xlu0 %v548, %s561
          %v563 = vpop.permute.xlu0 %562
          %vm564 = vcmask 7168
          %565 = vst.msk [vmem:[%s205] sm:$0xff] %vm564, %v551
          %566 = vst.msk [vmem:[%s205 + $0x8] sm:$0xff] %vm564, %v555
          %567 = vst.msk [vmem:[%s205 + $0x10] sm:$0xff] %vm564, %v559
          %568 = vst.msk [vmem:[%s205 + $0x18] sm:$0xff] %vm564, %v563
        $region48: #{tpu_custom_call.1} parent=31 // pred_fallthru
          _
        %p569 = scmp.lt.s32.totalorder %s21, 1
        %s570 = scalar_select %p569, %s21, 1
        %s571 = smul.addr %s570, 4
        %s572 = smul.addr %s571, 8
        %s573 = scalar_lea.vmem %s3, %s572
        // Predicated region
        $region49: #{tpu_custom_call.1} parent=31 // pred_check
          %p574 = pneg %p117
        $region50: #{tpu_custom_call.1} parent=31 // pred_check_branch
          %576 = sbr.rel (%p574) target = $region52
        $region51: #{tpu_custom_call.1} parent=31 // pred_region
          _
        $region52: #{tpu_custom_call.1} parent=31 // pred_fallthru
          _
      $region32: #{tpu_custom_call.1} parent=5 // pred_fallthru
        _
      %p577 = scmp.le.s32.totalorder 2, %s12
      // Predicated region
      $region53: #{tpu_custom_call.1} parent=5 // pred_check
        %p578 = pneg %p577
      $region54: #{tpu_custom_call.1} parent=5 // pred_check_branch
        %580 = sbr.rel (%p578) target = $region56
      $region55: #{tpu_custom_call.1} parent=5 // pred_region
        %s581 = ssub.s32 %s12, 2
        // Predicated region
        $region57: #{tpu_custom_call.1} parent=55 // pred_check
          %p582 = pneg %p123
        $region58: #{tpu_custom_call.1} parent=55 // pred_check_branch
          %584 = sbr.rel (%p582) target = $region60
        $region59: #{tpu_custom_call.1} parent=55 // pred_region
          %p585 = scmp.lt.s32.totalorder %s23, 1
          %s586 = scalar_select %p585, %s23, 1
          %s587 = smul.addr %s586, 4
          %s588 = smul.addr %s587, 8
          %s589 = scalar_lea.vmem %s3, %s588
        $region60: #{tpu_custom_call.1} parent=55 // pred_fallthru
          _
      $region56: #{tpu_custom_call.1} parent=5 // pred_fallthru
        _
    $region6: #{tpu_custom_call.1} parent=1 // loop_footer
      %s16 = sadd.s32 1, %s12
    $region7: #{tpu_custom_call.1} parent=1 // loop_footer_branch
      %11 = sbr.rel target = $region3
    $region8: #{tpu_custom_call.1} parent=1 // loop_exit
      _
    %590 = vsyncpa [#allocation5], 1
    %s591 = scalar_lea.sflag [#allocation5], 1
    %592 = vsyncpa %s591, 1

</llo_original>
